<compile_context>
chip_gen: v7x
topology: tpu7x:2x2x1
jax: 0.10.0
libtpu: 0.0.40
codegen_flags: <defaults>
</compile_context>

<pallas_src>
import jax
import jax.numpy as jnp
from jax import lax
from jax.experimental import pallas as pl
from jax.experimental.pallas import tpu as pltpu


def _round_up(n, m):
    return ((n + m - 1) // m) * m


def _divisor_tile(n, cap):
    """Largest divisor of n that is <= cap."""
    t = max(1, min(n, cap))
    while n % t:
        t -= 1
    return t


def rnn_kernel(emb_ref, w_h_ref, w_o_ref, b_o_ref, out_ref, hid_ref):
    # emb_ref: (S_tile, B_tile, Hp)  fused per-step input term (emb@W_e + b_i)
    # w_h_ref: (Hp, Hp)   w_o_ref: (Hp, Op)   b_o_ref: (1, Op)
    # out_ref: (B_tile, Op)          hid_ref: VMEM scratch (B_tile, Hp)
    s = pl.program_id(1)

    @pl.when(s == 0)
    def _():
        hid_ref[...] = jnp.zeros_like(hid_ref)

    s_tile = emb_ref.shape[0]

    def step(i, hidden):
        # Single matmul on the serial chain; input projection + bias already
        # folded into emb_ref.
        pre = emb_ref[i] + jnp.dot(hidden, w_h_ref[...],
                                   preferred_element_type=jnp.float32)
        return jnp.maximum(pre, 0.0)

    hid_ref[...] = lax.fori_loop(0, s_tile, step, hid_ref[...],
                                 unroll=min(s_tile, 8))

    @pl.when(s == pl.num_programs(1) - 1)
    def _():
        out_ref[...] = (jnp.dot(hid_ref[...], w_o_ref[...],
                                preferred_element_type=jnp.float32)
                        + b_o_ref[...])


def template_matching_rnn(x, emb_table, w_i2h, b_i2h, w_h2o, b_h2o, *,
                          s_tile=None):
    """x: (B, S) int32. emb_table: (V, H). w_i2h: (H, 2H). w_h2o: (O, H)."""
    B, S = x.shape
    V, H = emb_table.shape
    O = w_h2o.shape[0]

    # ---------------- glue (plain JAX, one-time) ----------------
    # cat(e, h) @ W_i2h.T + b == (e @ W_e + b) + h @ W_h
    w_e = w_i2h[:, :H].T                                   # (H, H) emb part
    w_h = w_i2h[:, H:].T                                   # (H, H) hidden part
    fused = jnp.dot(emb_table, w_e,
                    precision=lax.Precision.HIGHEST) + b_i2h   # (V, H)

    # Pad to (8, 128)-friendly shapes.
    Hp = _round_up(H, 128)
    Op = _round_up(O, 128)
    Bp = _round_up(B, 8) if B <= 128 else _round_up(B, 128)
    B_tile = min(Bp, 128)

    if s_tile is None:
        # Keep each double-buffered input tile around <= 2 MiB of VMEM.
        cap = max(1, min(256, (2 * 1024 * 1024) // (B_tile * Hp * 4)))
        s_tile = _divisor_tile(S, cap)
    assert S % s_tile == 0, "s_tile must divide S"

    fused_p = jnp.zeros((V, Hp), jnp.float32).at[:, :H].set(fused)
    w_h_p = jnp.zeros((Hp, Hp), jnp.float32).at[:H, :H].set(w_h)
    w_o_p = jnp.zeros((Hp, Op), jnp.float32).at[:H, :O].set(w_h2o.T)
    b_o_p = jnp.zeros((1, Op), jnp.float32).at[0, :O].set(b_h2o)

    # Gather the fused per-step input term, seq-major, batch-padded.
    g = jnp.transpose(fused_p[x], (1, 0, 2))               # (S, B, Hp)
    g = jnp.pad(g, ((0, 0), (0, Bp - B), (0, 0)))          # (S, Bp, Hp)

    grid = (Bp // B_tile, S // s_tile)

    out = pl.pallas_call(
        rnn_kernel,
        out_shape=jax.ShapeDtypeStruct((Bp, Op), jnp.float32),
        grid_spec=pltpu.PrefetchScalarGridSpec(
            num_scalar_prefetch=0,
            grid=grid,
            in_specs=[
                pl.BlockSpec((s_tile, B_tile, Hp), lambda b, s: (s, b, 0)),
                pl.BlockSpec((Hp, Hp), lambda b, s: (0, 0)),
                pl.BlockSpec((Hp, Op), lambda b, s: (0, 0)),
                pl.BlockSpec((1, Op), lambda b, s: (0, 0)),
            ],
            out_specs=pl.BlockSpec((B_tile, Op), lambda b, s: (b, 0)),
            scratch_shapes=[pltpu.VMEM((B_tile, Hp), jnp.float32)],
        ),
        compiler_params=pltpu.CompilerParams(
            dimension_semantics=("parallel", "arbitrary")),
    )(g, w_h_p, w_o_p, b_o_p)

    return out[:B, :O]


def reference_forward(x, emb_table, w_i2h, b_i2h, w_h2o, b_h2o):
    B, S = x.shape
    H = emb_table.shape[1]
    hidden = jnp.zeros((B, H), jnp.float32)
    for i in range(S):
        curr = emb_table[x[:, i]]
        combined = jnp.concatenate([curr, hidden], axis=1)
        hidden = jax.nn.relu(
            jnp.dot(combined, w_i2h.T, precision=lax.Precision.HIGHEST)
            + b_i2h)
    return jnp.dot(hidden, w_h2o.T, precision=lax.Precision.HIGHEST) + b_h2o


if __name__ == "__main__":
    # Small, deterministic setup.
    vocab_size, hidden_dim, output_dim = 16, 32, 8
    B, S = 2, 8

    key = jax.random.PRNGKey(0)
    k_emb, k_wi, k_bi, k_wo, k_bo, k_x = jax.random.split(key, 6)

    emb_table = jax.random.normal(k_emb, (vocab_size, hidden_dim), jnp.float32)
    lim_i = 1.0 / (2 * hidden_dim) ** 0.5
    w_i2h = jax.random.uniform(k_wi, (hidden_dim, 2 * hidden_dim), jnp.float32,
                               -lim_i, lim_i)
    b_i2h = jax.random.uniform(k_bi, (hidden_dim,), jnp.float32, -lim_i, lim_i)
    lim_o = 1.0 / hidden_dim ** 0.5
    w_h2o = jax.random.uniform(k_wo, (output_dim, hidden_dim), jnp.float32,
                               -lim_o, lim_o)
    b_h2o = jax.random.uniform(k_bo, (output_dim,), jnp.float32, -lim_o, lim_o)

    x = jax.random.randint(k_x, (B, S), 0, vocab_size, jnp.int32)

    # s_tile=4 -> sequence grid of 2 steps, exercising the VMEM-resident
    # hidden-state carry across grid iterations.
    out = template_matching_rnn(x, emb_table, w_i2h, b_i2h, w_h2o, b_h2o,
                                s_tile=4)
    out = jax.block_until_ready(out)

    ref = reference_forward(x, emb_table, w_i2h, b_i2h, w_h2o, b_h2o)
    assert out.shape == (B, output_dim)
    assert jnp.allclose(out, ref, atol=1e-4, rtol=1e-4), "mismatch vs reference"

    print("KERNEL_OK")
</pallas_src>

<mosaic_0001>
module attributes {stable_mosaic.version = 11 : i64} {
  func.func @rnn_kernel(%arg0: i32, %arg1: i32, %arg2: memref<4x8x128xf32, #tpu.memory_space<vmem>>, %arg3: memref<128x128xf32, #tpu.memory_space<vmem>>, %arg4: memref<128x128xf32, #tpu.memory_space<vmem>>, %arg5: memref<1x128xf32, #tpu.memory_space<vmem>>, %arg6: memref<8x128xf32, #tpu.memory_space<vmem>>, %arg7: memref<8x128xf32, #tpu.memory_space<vmem>>) attributes {dimension_semantics = [#tpu.dimension_semantics<parallel>, #tpu.dimension_semantics<arbitrary>], iteration_bounds = array<i64: 1, 2>, scalar_prefetch = 0 : i64, scratch_operands = 1 : i64, tpu.core_type = #tpu.core_type<tc>, window_params = [{transform_indices = @transform_0, window_bounds = array<i64: 4, 8, 128>}, {pipeline_mode = #tpu.pipeline_mode<synchronous>, transform_indices = @transform_1, window_bounds = array<i64: 128, 128>}, {pipeline_mode = #tpu.pipeline_mode<synchronous>, transform_indices = @transform_2, window_bounds = array<i64: 128, 128>}, {pipeline_mode = #tpu.pipeline_mode<synchronous>, transform_indices = @transform_3, window_bounds = array<i64: 1, 128>}, {transform_indices = @transform_4, window_bounds = array<i64: 8, 128>}]} {
    %c0_i32 = arith.constant 0 : i32
    %0 = arith.cmpi eq, %arg1, %c0_i32 : i32
    %1 = arith.extui %0 : i1 to i32
    %c0_i32_0 = arith.constant 0 : i32
    %2 = arith.cmpi ne, %1, %c0_i32_0 : i32
    scf.if %2 {
      %cst_30 = arith.constant 0.000000e+00 : f32
      %40 = vector.broadcast %cst_30 : f32 to vector<8x128xf32>
      %c0_31 = arith.constant 0 : index
      %c0_32 = arith.constant 0 : index
      %41 = vector.load %arg7[%c0_31, %c0_32] : memref<8x128xf32, #tpu.memory_space<vmem>>, vector<8x128xf32>
      tpu.vector_store %arg7[%c0_31, %c0_32], %40 {strides = array<i32>} : memref<8x128xf32, #tpu.memory_space<vmem>>, vector<8x128xf32>,
    } else {
    }
    %c0 = arith.constant 0 : index
    %c0_1 = arith.constant 0 : index
    %3 = vector.load %arg7[%c0, %c0_1] : memref<8x128xf32, #tpu.memory_space<vmem>>, vector<8x128xf32>
    %c0_i32_2 = arith.constant 0 : i32
    %4 = arith.index_cast %c0_i32_2 : i32 to index
    %c0_3 = arith.constant 0 : index
    %c0_4 = arith.constant 0 : index
    %5 = vector.load %arg2[%4, %c0_3, %c0_4] : memref<4x8x128xf32, #tpu.memory_space<vmem>>, vector<1x8x128xf32>
    %6 = vector.shape_cast %5 : vector<1x8x128xf32> to vector<8x128xf32>
    %c0_5 = arith.constant 0 : index
    %c0_6 = arith.constant 0 : index
    %7 = vector.load %arg3[%c0_5, %c0_6] : memref<128x128xf32, #tpu.memory_space<vmem>>, vector<128x128xf32>
    %cst = arith.constant dense<0.000000e+00> : vector<8x128xf32>
    %8 = tpu.matmul %3, %7, %cst {dimension_numbers = #tpu.dot_dimension_numbers<[1], [0], [0], [1], [0, 0, 1, 1], [], []>} : vector<8x128xf32>, vector<128x128xf32>, vector<8x128xf32> -> vector<8x128xf32>
    %9 = arith.addf %6, %8 : vector<8x128xf32>
    %cst_7 = arith.constant 0.000000e+00 : f32
    %10 = vector.broadcast %cst_7 : f32 to vector<8x128xf32>
    %11 = arith.maximumf %9, %10 : vector<8x128xf32>
    %c1_i32 = arith.constant 1 : i32
    %12 = arith.index_cast %c1_i32 : i32 to index
    %c0_8 = arith.constant 0 : index
    %c0_9 = arith.constant 0 : index
    %13 = vector.load %arg2[%12, %c0_8, %c0_9] : memref<4x8x128xf32, #tpu.memory_space<vmem>>, vector<1x8x128xf32>
    %14 = vector.shape_cast %13 : vector<1x8x128xf32> to vector<8x128xf32>
    %c0_10 = arith.constant 0 : index
    %c0_11 = arith.constant 0 : index
    %15 = vector.load %arg3[%c0_10, %c0_11] : memref<128x128xf32, #tpu.memory_space<vmem>>, vector<128x128xf32>
    %cst_12 = arith.constant dense<0.000000e+00> : vector<8x128xf32>
    %16 = tpu.matmul %11, %15, %cst_12 {dimension_numbers = #tpu.dot_dimension_numbers<[1], [0], [0], [1], [0, 0, 1, 1], [], []>} : vector<8x128xf32>, vector<128x128xf32>, vector<8x128xf32> -> vector<8x128xf32>
    %17 = arith.addf %14, %16 : vector<8x128xf32>
    %cst_13 = arith.constant 0.000000e+00 : f32
    %18 = vector.broadcast %cst_13 : f32 to vector<8x128xf32>
    %19 = arith.maximumf %17, %18 : vector<8x128xf32>
    %c2_i32 = arith.constant 2 : i32
    %20 = arith.index_cast %c2_i32 : i32 to index
    %c0_14 = arith.constant 0 : index
    %c0_15 = arith.constant 0 : index
    %21 = vector.load %arg2[%20, %c0_14, %c0_15] : memref<4x8x128xf32, #tpu.memory_space<vmem>>, vector<1x8x128xf32>
    %22 = vector.shape_cast %21 : vector<1x8x128xf32> to vector<8x128xf32>
    %c0_16 = arith.constant 0 : index
    %c0_17 = arith.constant 0 : index
    %23 = vector.load %arg3[%c0_16, %c0_17] : memref<128x128xf32, #tpu.memory_space<vmem>>, vector<128x128xf32>
    %cst_18 = arith.constant dense<0.000000e+00> : vector<8x128xf32>
    %24 = tpu.matmul %19, %23, %cst_18 {dimension_numbers = #tpu.dot_dimension_numbers<[1], [0], [0], [1], [0, 0, 1, 1], [], []>} : vector<8x128xf32>, vector<128x128xf32>, vector<8x128xf32> -> vector<8x128xf32>
    %25 = arith.addf %22, %24 : vector<8x128xf32>
    %cst_19 = arith.constant 0.000000e+00 : f32
    %26 = vector.broadcast %cst_19 : f32 to vector<8x128xf32>
    %27 = arith.maximumf %25, %26 : vector<8x128xf32>
    %c3_i32 = arith.constant 3 : i32
    %28 = arith.index_cast %c3_i32 : i32 to index
    %c0_20 = arith.constant 0 : index
    %c0_21 = arith.constant 0 : index
    %29 = vector.load %arg2[%28, %c0_20, %c0_21] : memref<4x8x128xf32, #tpu.memory_space<vmem>>, vector<1x8x128xf32>
    %30 = vector.shape_cast %29 : vector<1x8x128xf32> to vector<8x128xf32>
    %c0_22 = arith.constant 0 : index
    %c0_23 = arith.constant 0 : index
    %31 = vector.load %arg3[%c0_22, %c0_23] : memref<128x128xf32, #tpu.memory_space<vmem>>, vector<128x128xf32>
    %cst_24 = arith.constant dense<0.000000e+00> : vector<8x128xf32>
    %32 = tpu.matmul %27, %31, %cst_24 {dimension_numbers = #tpu.dot_dimension_numbers<[1], [0], [0], [1], [0, 0, 1, 1], [], []>} : vector<8x128xf32>, vector<128x128xf32>, vector<8x128xf32> -> vector<8x128xf32>
    %33 = arith.addf %30, %32 : vector<8x128xf32>
    %cst_25 = arith.constant 0.000000e+00 : f32
    %34 = vector.broadcast %cst_25 : f32 to vector<8x128xf32>
    %35 = arith.maximumf %33, %34 : vector<8x128xf32>
    %c4_i32 = arith.constant 4 : i32
    %c0_26 = arith.constant 0 : index
    %c0_27 = arith.constant 0 : index
    %36 = vector.load %arg7[%c0_26, %c0_27] : memref<8x128xf32, #tpu.memory_space<vmem>>, vector<8x128xf32>
    tpu.vector_store %arg7[%c0_26, %c0_27], %35 {strides = array<i32>} : memref<8x128xf32, #tpu.memory_space<vmem>>, vector<8x128xf32>,
    %c1_i32_28 = arith.constant 1 : i32
    %37 = arith.cmpi eq, %arg1, %c1_i32_28 : i32
    %38 = arith.extui %37 : i1 to i32
    %c0_i32_29 = arith.constant 0 : i32
    %39 = arith.cmpi ne, %38, %c0_i32_29 : i32
    scf.if %39 {
      %c0_30 = arith.constant 0 : index
      %c0_31 = arith.constant 0 : index
      %40 = vector.load %arg7[%c0_30, %c0_31] : memref<8x128xf32, #tpu.memory_space<vmem>>, vector<8x128xf32>
      %c0_32 = arith.constant 0 : index
      %c0_33 = arith.constant 0 : index
      %41 = vector.load %arg4[%c0_32, %c0_33] : memref<128x128xf32, #tpu.memory_space<vmem>>, vector<128x128xf32>
      %cst_34 = arith.constant dense<0.000000e+00> : vector<8x128xf32>
      %42 = tpu.matmul %40, %41, %cst_34 {dimension_numbers = #tpu.dot_dimension_numbers<[1], [0], [0], [1], [0, 0, 1, 1], [], []>} : vector<8x128xf32>, vector<128x128xf32>, vector<8x128xf32> -> vector<8x128xf32>
      %c0_35 = arith.constant 0 : index
      %c0_36 = arith.constant 0 : index
      %43 = vector.load %arg5[%c0_35, %c0_36] : memref<1x128xf32, #tpu.memory_space<vmem>>, vector<1x128xf32>
      %44 = vector.broadcast %43 : vector<1x128xf32> to vector<8x128xf32>
      %45 = arith.addf %42, %44 : vector<8x128xf32>
      %c0_37 = arith.constant 0 : index
      %c0_38 = arith.constant 0 : index
      %46 = vector.load %arg6[%c0_37, %c0_38] : memref<8x128xf32, #tpu.memory_space<vmem>>, vector<8x128xf32>
      tpu.vector_store %arg6[%c0_37, %c0_38], %45 {strides = array<i32>} : memref<8x128xf32, #tpu.memory_space<vmem>>, vector<8x128xf32>,
    } else {
    }
    return
  }
  func.func @transform_0(%arg0: i32, %arg1: i32) -> (i32, i32, i32) {
    %c0_i32 = arith.constant 0 : i32
    %c0_i32_0 = arith.constant 0 : i32
    return %arg1, %arg0, %c0_i32 : i32, i32, i32
  }
  func.func @transform_1(%arg0: i32, %arg1: i32) -> (i32, i32) {
    %c0_i32 = arith.constant 0 : i32
    %c0_i32_0 = arith.constant 0 : i32
    %c0_i32_1 = arith.constant 0 : i32
    return %c0_i32, %c0_i32_0 : i32, i32
  }
  func.func @transform_2(%arg0: i32, %arg1: i32) -> (i32, i32) {
    %c0_i32 = arith.constant 0 : i32
    %c0_i32_0 = arith.constant 0 : i32
    %c0_i32_1 = arith.constant 0 : i32
    return %c0_i32, %c0_i32_0 : i32, i32
  }
  func.func @transform_3(%arg0: i32, %arg1: i32) -> (i32, i32) {
    %c0_i32 = arith.constant 0 : i32
    %c0_i32_0 = arith.constant 0 : i32
    %c0_i32_1 = arith.constant 0 : i32
    return %c0_i32, %c0_i32_0 : i32, i32
  }
  func.func @transform_4(%arg0: i32, %arg1: i32) -> (i32, i32) {
    %c0_i32 = arith.constant 0 : i32
    %c0_i32_0 = arith.constant 0 : i32
    return %arg0, %c0_i32 : i32, i32
  }
}

</mosaic_0001>

<llo_original>
// kernel: tpu_custom_call.1
$region0: #{tpu_custom_call.1}
  #allocation0 [shape = 'u32[]', space=smem, size = 0x4, offset = 0x4, fixed_abs, tag = 'smem constant byte address 0x4 - core index']
  #allocation1 [shape = 'u32[144,128]{1,0:T(1,128)}', space=vmem, size = 0x12000, scoped, tag = 'internal scratch']
  #allocation2 [shape = 'f32[8,128]{1,0:T(8,128)}', space=vmem, size = 0x1000, scoped, tag = 'scratch operand']
  %s0 = inlined_call_operand.hbm [shape: f32[8,8,128], index: 0, kind: input, shape index: {}]
  %s1 = inlined_call_operand.hbm [shape: f32[128,128], index: 1, kind: input, shape index: {}]
  %s2 = inlined_call_operand.hbm [shape: f32[128,128], index: 2, kind: input, shape index: {}]
  %s3 = inlined_call_operand.vmem [shape: f32[1,128], index: 3, kind: input, shape index: {}]
  %s4 = inlined_call_operand.hbm [shape: f32[8,128], index: 4, kind: output, shape index: {}]
  %s5 = sld [smem:[#allocation0]]
  $region69: #{tpu_custom_call.1} parent=0
    _
  %s7 = ssub.s32 1, %s5
  %s8 = scalar_select 0, %s7, %s5
  $region1: #{tpu_custom_call.1} parent=0
    #allocation3 [shape = 'u8[32768]{0}', space=vmem, size = 0x8000, scoped, tag = 'input window, operand 0']
    #allocation4 [shape = 's32[2]{0}', space=sflag, size = 0x8, scoped, tag = 'scoped memory for tpu_custom_call.1']
    #allocation5 [shape = 's32[2]{0}', space=sflag, size = 0x8, scoped, tag = 'scoped memory for tpu_custom_call.1']
    #allocation6 [shape = 'u8[65536]{0}', space=vmem, size = 0x10000, scoped, tag = 'input window, operand 1, single buffered']
    #allocation7 [shape = 's32[1]{0}', space=sflag, size = 0x4, scoped, tag = 'scoped memory for tpu_custom_call.1']
    #allocation8 [shape = 'u8[65536]{0}', space=vmem, size = 0x10000, scoped, tag = 'input window, operand 2, single buffered']
    #allocation9 [shape = 'u8[4096]{0}', space=vmem, size = 0x1000, scoped, tag = 'output window, operand 0, single buffered']
    %9 = vsyncpa [#allocation4], 0
    %s10 = scalar_lea.sflag [#allocation4], 1
    %11 = vsyncpa %s10, 0
    %12 = vsyncpa [#allocation7], 0
    %13 = vsyncpa [#allocation5], 0
    loop: start=0, step=1, limit=4
    $region2: #{tpu_custom_call.1} parent=1 // loop_pre_header
      _
    $region3: #{tpu_custom_call.1} parent=1 // loop_header
      %s15 = sphi 0, %s19
      %p16 = scmp.ge.s32.totalorder %s15, 4
      %s22 = sphi 0, %s34
      %s23 = sphi 0, %s30
      %s24 = sphi 0, %s22
      %s25 = sphi 0, %s23
      %s26 = sphi 0, %s24
      %s27 = sphi 0, %s25
      %s39 = sphi 0, %s41
      %s42 = sphi 0, %s39
      %s43 = sphi 0, %s42
      %s59 = sphi 0, %s43
      %s63 = sphi 0, %s63
      %s65 = sphi 0, %s63
      %s66 = sphi 0, %s65
      %s80 = sphi 0, %s66
      %s84 = sphi 0, %s84
      %s86 = sphi 0, %s84
      %s87 = sphi 0, %s86
      %s101 = sphi 0, %s87
      %s105 = sphi 0, %s105
      %s107 = sphi 0, %s105
      %s108 = sphi 0, %s107
      %s122 = sphi 0, %s108
      %s128 = sphi 0, %s130
      %s131 = sphi 0, %s128
      %s132 = sphi 0, %s131
      %s148 = sphi 0, %s132
    $region4: #{tpu_custom_call.1} parent=1 // loop_header_branch
      %18 = sbr.rel (%p16) target = $region8
    $region5: #{tpu_custom_call.1} parent=1 // loop_body
      %s20 = ssub.s32 %s15, 1
      %s21 = ssub.s32 %s15, 2
      %s28 = sadd.s32 1, %s23
      %p29 = scmp.ge.s32.totalorder %s28, 2
      %s30 = scalar_select %p29, 0, %s28
      %s31 = sadd.s32 1, %s22
      %s32 = scalar_select %p29, %s31, %s22
      %p33 = scmp.ge.s32.totalorder %s32, 1
      %s34 = scalar_select %p33, 0, %s32
      %s35 = ssub.s32 %s23, %s30
      %s36 = ssub.s32 %s22, %s34
      %s37 = sor.u32 %s35, %s36
      %p38 = scmp.eq.s32.totalorder %s37, 0
      %s40 = sadd.s32 %s39, 1
      %s41 = scalar_select %p38, %s39, %s40
      %p44 = pneg %p38
      %p45 = scmp.eq.s32.totalorder %s15, 1
      %p46 = por %p44, %p45
      %p47 = scmp.ne.s32.totalorder %s39, %s42
      %p48 = scmp.eq.s32.totalorder %s15, 0
      %p49 = por %p47, %p48
      %p50 = scmp.ne.s32.totalorder %s39, %s42
      %p51 = scmp.eq.s32.totalorder %s20, 1
      %p52 = por %p50, %p51
      %p53 = scmp.ne.s32.totalorder %s42, %s43
      %p54 = scmp.eq.s32.totalorder %s20, 0
      %p55 = por %p53, %p54
      %p56 = scmp.ne.s32.totalorder %s42, %s43
      %p57 = scmp.eq.s32.totalorder %s21, 1
      %p58 = por %p56, %p57
      %p60 = scmp.ne.s32.totalorder %s43, %s59
      %p61 = scmp.eq.s32.totalorder %s21, 0
      %p62 = por %p60, %p61
      %s64 = sadd.s32 %s63, 1
      %p67 = scmp.eq.s32.totalorder %s15, 1
      %p68 = scmp.ne.s32.totalorder %s63, %s65
      %p69 = scmp.eq.s32.totalorder %s15, 0
      %p70 = por %p68, %p69
      %p71 = scmp.ne.s32.totalorder %s63, %s65
      %p72 = scmp.eq.s32.totalorder %s20, 1
      %p73 = por %p71, %p72
      %p74 = scmp.ne.s32.totalorder %s65, %s66
      %p75 = scmp.eq.s32.totalorder %s20, 0
      %p76 = por %p74, %p75
      %p77 = scmp.ne.s32.totalorder %s65, %s66
      %p78 = scmp.eq.s32.totalorder %s21, 1
      %p79 = por %p77, %p78
      %p81 = scmp.ne.s32.totalorder %s66, %s80
      %p82 = scmp.eq.s32.totalorder %s21, 0
      %p83 = por %p81, %p82
      %s85 = sadd.s32 %s84, 1
      %p88 = scmp.eq.s32.totalorder %s15, 1
      %p89 = scmp.ne.s32.totalorder %s84, %s86
      %p90 = scmp.eq.s32.totalorder %s15, 0
      %p91 = por %p89, %p90
      %p92 = scmp.ne.s32.totalorder %s84, %s86
      %p93 = scmp.eq.s32.totalorder %s20, 1
      %p94 = por %p92, %p93
      %p95 = scmp.ne.s32.totalorder %s86, %s87
      %p96 = scmp.eq.s32.totalorder %s20, 0
      %p97 = por %p95, %p96
      %p98 = scmp.ne.s32.totalorder %s86, %s87
      %p99 = scmp.eq.s32.totalorder %s21, 1
      %p100 = por %p98, %p99
      %p102 = scmp.ne.s32.totalorder %s87, %s101
      %p103 = scmp.eq.s32.totalorder %s21, 0
      %p104 = por %p102, %p103
      %s106 = sadd.s32 %s105, 1
      %p109 = scmp.eq.s32.totalorder %s15, 1
      %p110 = scmp.ne.s32.totalorder %s105, %s107
      %p111 = scmp.eq.s32.totalorder %s15, 0
      %p112 = por %p110, %p111
      %p113 = scmp.ne.s32.totalorder %s105, %s107
      %p114 = scmp.eq.s32.totalorder %s20, 1
      %p115 = por %p113, %p114
      %p116 = scmp.ne.s32.totalorder %s107, %s108
      %p117 = scmp.eq.s32.totalorder %s20, 0
      %p118 = por %p116, %p117
      %p119 = scmp.ne.s32.totalorder %s107, %s108
      %p120 = scmp.eq.s32.totalorder %s21, 1
      %p121 = por %p119, %p120
      %p123 = scmp.ne.s32.totalorder %s108, %s122
      %p124 = scmp.eq.s32.totalorder %s21, 0
      %p125 = por %p123, %p124
      %s126 = ssub.s32 %s22, %s34
      %p127 = scmp.eq.s32.totalorder %s126, 0
      %s129 = sadd.s32 %s128, 1
      %s130 = scalar_select %p127, %s128, %s129
      %p133 = pneg %p127
      %p134 = scmp.eq.s32.totalorder %s15, 1
      %p135 = por %p133, %p134
      %p136 = scmp.ne.s32.totalorder %s128, %s131
      %p137 = scmp.eq.s32.totalorder %s15, 0
      %p138 = por %p136, %p137
      %p139 = scmp.ne.s32.totalorder %s128, %s131
      %p140 = scmp.eq.s32.totalorder %s20, 1
      %p141 = por %p139, %p140
      %p142 = scmp.ne.s32.totalorder %s131, %s132
      %p143 = scmp.eq.s32.totalorder %s20, 0
      %p144 = por %p142, %p143
      %p145 = scmp.ne.s32.totalorder %s131, %s132
      %p146 = scmp.eq.s32.totalorder %s21, 1
      %p147 = por %p145, %p146
      %p149 = scmp.ne.s32.totalorder %s132, %s148
      %p150 = scmp.eq.s32.totalorder %s21, 0
      %p151 = por %p149, %p150
      %p152 = scmp.le.s32.totalorder 1, %s15
      %p153 = scmp.lt.s32.totalorder %s15, 3
      %p154 = pnand %p152, %p153
      %p155 = pneg %p154
      // Predicated region
      $region9: #{tpu_custom_call.1} parent=5 // pred_check
        _
      $region10: #{tpu_custom_call.1} parent=5 // pred_check_branch
        %157 = sbr.rel (%p154) target = $region12
      $region11: #{tpu_custom_call.1} parent=5 // pred_region
        %s158 = ssub.s32 %s15, 1
        // Predicated region
        $region13: #{tpu_custom_call.1} parent=11 // pred_check
          %p159 = pneg %p76
        $region14: #{tpu_custom_call.1} parent=11 // pred_check_branch
          %161 = sbr.rel (%p159) target = $region16
        $region15: #{tpu_custom_call.1} parent=11 // pred_region
          %s163 = ssub.s32 2048, 2048
          %164 = vsyncadd [#allocation7], %s163
          %s165 = sshll.u32 [#allocation6], 4
          %s166 = int_to_ptr.vmem [resolvable:$true] %s165
          %171 = dma.hbm_to_vmem [thread:$0]  %s1, 2048, %s166, [#allocation7], 128, 128, 8
        $region16: #{tpu_custom_call.1} parent=11 // pred_fallthru
          _
        // Predicated region
        $region17: #{tpu_custom_call.1} parent=11 // pred_check
          %p172 = pneg %p97
        $region18: #{tpu_custom_call.1} parent=11 // pred_check_branch
          %174 = sbr.rel (%p172) target = $region20
        $region19: #{tpu_custom_call.1} parent=11 // pred_region
          %s176 = ssub.s32 2048, 2048
          %177 = vsyncadd [#allocation7], %s176
          %s178 = sshll.u32 [#allocation8], 4
          %s179 = int_to_ptr.vmem [resolvable:$true] %s178
          %184 = dma.hbm_to_vmem [thread:$0]  %s2, 2048, %s179, [#allocation7], 128, 128, 8
        $region20: #{tpu_custom_call.1} parent=11 // pred_fallthru
          _
        // Predicated region
        $region21: #{tpu_custom_call.1} parent=11 // pred_check
          %p185 = pneg %p118
        $region22: #{tpu_custom_call.1} parent=11 // pred_check_branch
          %187 = sbr.rel (%p185) target = $region24
        $region23: #{tpu_custom_call.1} parent=11 // pred_region
          _
        $region24: #{tpu_custom_call.1} parent=11 // pred_fallthru
          _
      $region12: #{tpu_custom_call.1} parent=5 // pred_fallthru
        _
      %p188 = scmp.lt.s32.totalorder %s15, 2
      // Predicated region
      $region25: #{tpu_custom_call.1} parent=5 // pred_check
        %p189 = pneg %p188
      $region26: #{tpu_custom_call.1} parent=5 // pred_check_branch
        %191 = sbr.rel (%p189) target = $region28
      $region27: #{tpu_custom_call.1} parent=5 // pred_region
        // Predicated region
        $region29: #{tpu_custom_call.1} parent=27 // pred_check
          %p192 = pneg %p49
        $region30: #{tpu_custom_call.1} parent=27 // pred_check_branch
          %194 = sbr.rel (%p192) target = $region32
        $region31: #{tpu_custom_call.1} parent=27 // pred_region
          %s195 = sand.u32 %s39, 1
          %s196 = scalar_lea.sflag [#allocation4], %s195
          %s197 = sand.u32 %s39, 1
          %s198 = smul.addr %s197, 32
          %s199 = scalar_lea.vmem [#allocation3], %s198
          %s200 = smul.u32 4, %s23
          %s202 = ssub.s32 512, 512
          %203 = vsyncadd %s196, %s202
          %s204 = sadd.s32 %s22, %s200
          %s205 = smul.addr %s204, 128
          %s206 = scalar_lea.hbm %s0, %s205
          %s207 = sshll.u32 %s199, 4
          %s208 = int_to_ptr.vmem [resolvable:$true] %s207
          %213 = dma.hbm_to_vmem [thread:$0]  %s206, 512, %s208, %s196, 128, 128, 8
        $region32: #{tpu_custom_call.1} parent=27 // pred_fallthru
          _
      $region28: #{tpu_custom_call.1} parent=5 // pred_fallthru
        _
      %p214 = scmp.le.s32.totalorder 1, %s15
      %p215 = scmp.lt.s32.totalorder %s15, 3
      %p216 = pnand %p214, %p215
      %p217 = pneg %p216
      // Predicated region
      $region33: #{tpu_custom_call.1} parent=5 // pred_check
        _
      $region34: #{tpu_custom_call.1} parent=5 // pred_check_branch
        %219 = sbr.rel (%p216) target = $region36
      $region35: #{tpu_custom_call.1} parent=5 // pred_region
        %s220 = ssub.s32 %s15, 1
        %s221 = sand.u32 %s42, 1
        %s222 = scalar_lea.sflag [#allocation4], %s221
        %s223 = sand.u32 %s42, 1
        %s224 = smul.addr %s223, 32
        %s225 = scalar_lea.vmem [#allocation3], %s224
        // Predicated region
        $region37: #{tpu_custom_call.1} parent=35 // pred_check
          %p226 = pneg %p55
        $region38: #{tpu_custom_call.1} parent=35 // pred_check_branch
          %228 = sbr.rel (%p226) target = $region40
        $region39: #{tpu_custom_call.1} parent=35 // pred_region
          %229 = dma.done %s222, 512
        $region40: #{tpu_custom_call.1} parent=35 // pred_fallthru
          _
        // Predicated region
        $region41: #{tpu_custom_call.1} parent=35 // pred_check
          %p230 = pneg %p76
        $region42: #{tpu_custom_call.1} parent=35 // pred_check_branch
          %232 = sbr.rel (%p230) target = $region44
        $region43: #{tpu_custom_call.1} parent=35 // pred_region
          %233 = dma.done [#allocation7], 2048
        $region44: #{tpu_custom_call.1} parent=35 // pred_fallthru
          _
        // Predicated region
        $region45: #{tpu_custom_call.1} parent=35 // pred_check
          %p234 = pneg %p97
        $region46: #{tpu_custom_call.1} parent=35 // pred_check_branch
          %236 = sbr.rel (%p234) target = $region48
        $region47: #{tpu_custom_call.1} parent=35 // pred_region
          %237 = dma.done [#allocation7], 2048
        $region48: #{tpu_custom_call.1} parent=35 // pred_fallthru
          _
        %s238 = sand.u32 %s42, 1
        %s239 = scalar_lea.sflag [#allocation4], %s238
        %s240 = sand.u32 %s42, 1
        %s241 = smul.addr %s240, 32
        %s242 = scalar_lea.vmem [#allocation3], %s241
        %p243 = pneg %p55
        %p244 = pneg %p52
        %p245 = pneg %p76
        %p246 = pneg %p73
        %p247 = pneg %p97
        %p248 = pneg %p94
        %p249 = pneg %p118
        %p250 = pneg %p115
        %p251 = pneg %p144
        %p252 = pneg %p141
        %s253 = smul.u32 4, %s25
        %p254 = scmp.eq.s32.totalorder %s25, 0
        // Predicated region
        $region49: #{tpu_custom_call.1} parent=35 // pred_check
          %p255 = pneg %p254
        $region50: #{tpu_custom_call.1} parent=35 // pred_check_branch
          %257 = sbr.rel (%p255) target = $region52
        $region51: #{tpu_custom_call.1} parent=35 // pred_region
          %258 = vst [vmem:[#allocation2] sm:$0xff] 0.0
        $region52: #{tpu_custom_call.1} parent=35 // pred_fallthru
          _
        %v259 = vld [vmem:[#allocation2] sm:$0xff]
        %v260 = vld [vmem:[%s225] sm:$0xff]
        %v261 = vld [vmem:[#allocation6] sm:$0xff]
        %v262 = vld [vmem:[#allocation6 + $0x8] sm:$0xff]
        %v263 = vld [vmem:[#allocation6 + $0x10] sm:$0xff]
        %v264 = vld [vmem:[#allocation6 + $0x18] sm:$0xff]
        %v265 = vld [vmem:[#allocation6 + $0x20] sm:$0xff]
        %v266 = vld [vmem:[#allocation6 + $0x28] sm:$0xff]
        %v267 = vld [vmem:[#allocation6 + $0x30] sm:$0xff]
        %v268 = vld [vmem:[#allocation6 + $0x38] sm:$0xff]
        %v269 = vld [vmem:[#allocation6 + $0x40] sm:$0xff]
        %v270 = vld [vmem:[#allocation6 + $0x48] sm:$0xff]
        %v271 = vld [vmem:[#allocation6 + $0x50] sm:$0xff]
        %v272 = vld [vmem:[#allocation6 + $0x58] sm:$0xff]
        %v273 = vld [vmem:[#allocation6 + $0x60] sm:$0xff]
        %v274 = vld [vmem:[#allocation6 + $0x68] sm:$0xff]
        %v275 = vld [vmem:[#allocation6 + $0x70] sm:$0xff]
        %v276 = vld [vmem:[#allocation6 + $0x78] sm:$0xff]
        %277 = vmatprep.subr.mxu0 0.0
        %278 = vmatpush1.msra.mxu0 %v261
        %279 = vmatprep.subr.mxu0 0.0
        %280 = vmatpush1.msra.mxu0 %v262
        %281 = vmatprep.subr.mxu0 0.0
        %282 = vmatpush1.msra.mxu0 %v263
        %283 = vmatprep.subr.mxu0 0.0
        %284 = vmatpush1.msra.mxu0 %v264
        %285 = vmatprep.subr.mxu0 0.0
        %286 = vmatpush1.msra.mxu0 %v265
        %287 = vmatprep.subr.mxu0 0.0
        %288 = vmatpush1.msra.mxu0 %v266
        %289 = vmatprep.subr.mxu0 0.0
        %290 = vmatpush1.msra.mxu0 %v267
        %291 = vmatprep.subr.mxu0 0.0
        %292 = vmatpush1.msra.mxu0 %v268
        %293 = vmatprep.subr.mxu0 0.0
        %294 = vmatpush1.msra.mxu0 %v269
        %295 = vmatprep.subr.mxu0 0.0
        %296 = vmatpush1.msra.mxu0 %v270
        %297 = vmatprep.subr.mxu0 0.0
        %298 = vmatpush1.msra.mxu0 %v271
        %299 = vmatprep.subr.mxu0 0.0
        %300 = vmatpush1.msra.mxu0 %v272
        %301 = vmatprep.subr.mxu0 0.0
        %302 = vmatpush1.msra.mxu0 %v273
        %303 = vmatprep.subr.mxu0 0.0
        %304 = vmatpush1.msra.mxu0 %v274
        %305 = vmatprep.subr.mxu0 0.0
        %306 = vmatpush1.msra.mxu0 %v275
        %307 = vmatprep.subr.mxu0 0.0
        %308 = vmatpush1.msra.mxu0 %v276
        %309 = vmatprep.subr.mxu0 0.0
        %310 = vmatpush1.msra.mxu0 0.0
        %311 = vmatprep.subr.mxu0 0.0
        %312 = vmatpush1.msra.mxu0 0.0
        %313 = vmatprep.subr.mxu0 0.0
        %314 = vmatpush1.msra.mxu0 0.0
        %315 = vmatprep.subr.mxu0 0.0
        %316 = vmatpush1.msra.mxu0 0.0
        %317 = vmatprep.subr.mxu0 0.0
        %318 = vmatpush1.msra.mxu0 0.0
        %319 = vmatprep.subr.mxu0 0.0
        %320 = vmatpush1.msra.mxu0 0.0
        %321 = vmatprep.subr.mxu0 0.0
        %322 = vmatpush1.msra.mxu0 0.0
        %323 = vmatprep.subr.mxu0 0.0
        %324 = vmatpush1.msra.mxu0 0.0
        %325 = vmatprep.subr.mxu0 0.0
        %326 = vmatpush1.msra.mxu0 0.0
        %327 = vmatprep.subr.mxu0 0.0
        %328 = vmatpush1.msra.mxu0 0.0
        %329 = vmatprep.subr.mxu0 0.0
        %330 = vmatpush1.msra.mxu0 0.0
        %331 = vmatprep.subr.mxu0 0.0
        %332 = vmatpush1.msra.mxu0 0.0
        %333 = vmatprep.subr.mxu0 0.0
        %334 = vmatpush1.msra.mxu0 0.0
        %335 = vmatprep.subr.mxu0 0.0
        %336 = vmatpush1.msra.mxu0 0.0
        %337 = vmatprep.subr.mxu0 0.0
        %338 = vmatpush1.msra.mxu0 0.0
        %339 = vmatprep.subr.mxu0 0.0
        %340 = vmatpush1.msra.mxu0 0.0
        %341 = vmatprep.mubr.f32.mxu0 0.0
        %342 = vmatmul.mubr.f32.gmra.mrb[0].mxu0 %v259
        %v343 = vpop.f32.mrb[0].mxu0
        %v344 = vadd.f32 0.0, %v343
        %v345 = vpop.f32.mrb[0].mxu0
        %346 = vdwg.mxu0
        %v347 = vadd.f32 %v260, %v344
        %v348 = vmax.f32 %v347, 0.0
        %s349 = scalar_lea.vmem %s225, 8 [#allocation3]
        %v350 = vld [vmem:[%s349] sm:$0xff]
        %351 = vmatprep.subr.mxu0 0.0
        %352 = vmatpush1.msra.mxu0 %v261
        %353 = vmatprep.subr.mxu0 0.0
        %354 = vmatpush1.msra.mxu0 %v262
        %355 = vmatprep.subr.mxu0 0.0
        %356 = vmatpush1.msra.mxu0 %v263
        %357 = vmatprep.subr.mxu0 0.0
        %358 = vmatpush1.msra.mxu0 %v264
        %359 = vmatprep.subr.mxu0 0.0
        %360 = vmatpush1.msra.mxu0 %v265
        %361 = vmatprep.subr.mxu0 0.0
        %362 = vmatpush1.msra.mxu0 %v266
        %363 = vmatprep.subr.mxu0 0.0
        %364 = vmatpush1.msra.mxu0 %v267
        %365 = vmatprep.subr.mxu0 0.0
        %366 = vmatpush1.msra.mxu0 %v268
        %367 = vmatprep.subr.mxu0 0.0
        %368 = vmatpush1.msra.mxu0 %v269
        %369 = vmatprep.subr.mxu0 0.0
        %370 = vmatpush1.msra.mxu0 %v270
        %371 = vmatprep.subr.mxu0 0.0
        %372 = vmatpush1.msra.mxu0 %v271
        %373 = vmatprep.subr.mxu0 0.0
        %374 = vmatpush1.msra.mxu0 %v272
        %375 = vmatprep.subr.mxu0 0.0
        %376 = vmatpush1.msra.mxu0 %v273
        %377 = vmatprep.subr.mxu0 0.0
        %378 = vmatpush1.msra.mxu0 %v274
        %379 = vmatprep.subr.mxu0 0.0
        %380 = vmatpush1.msra.mxu0 %v275
        %381 = vmatprep.subr.mxu0 0.0
        %382 = vmatpush1.msra.mxu0 %v276
        %383 = vmatprep.subr.mxu0 0.0
        %384 = vmatpush1.msra.mxu0 0.0
        %385 = vmatprep.subr.mxu0 0.0
        %386 = vmatpush1.msra.mxu0 0.0
        %387 = vmatprep.subr.mxu0 0.0
        %388 = vmatpush1.msra.mxu0 0.0
        %389 = vmatprep.subr.mxu0 0.0
        %390 = vmatpush1.msra.mxu0 0.0
        %391 = vmatprep.subr.mxu0 0.0
        %392 = vmatpush1.msra.mxu0 0.0
        %393 = vmatprep.subr.mxu0 0.0
        %394 = vmatpush1.msra.mxu0 0.0
        %395 = vmatprep.subr.mxu0 0.0
        %396 = vmatpush1.msra.mxu0 0.0
        %397 = vmatprep.subr.mxu0 0.0
        %398 = vmatpush1.msra.mxu0 0.0
        %399 = vmatprep.subr.mxu0 0.0
        %400 = vmatpush1.msra.mxu0 0.0
        %401 = vmatprep.subr.mxu0 0.0
        %402 = vmatpush1.msra.mxu0 0.0
        %403 = vmatprep.subr.mxu0 0.0
        %404 = vmatpush1.msra.mxu0 0.0
        %405 = vmatprep.subr.mxu0 0.0
        %406 = vmatpush1.msra.mxu0 0.0
        %407 = vmatprep.subr.mxu0 0.0
        %408 = vmatpush1.msra.mxu0 0.0
        %409 = vmatprep.subr.mxu0 0.0
        %410 = vmatpush1.msra.mxu0 0.0
        %411 = vmatprep.subr.mxu0 0.0
        %412 = vmatpush1.msra.mxu0 0.0
        %413 = vmatprep.subr.mxu0 0.0
        %414 = vmatpush1.msra.mxu0 0.0
        %415 = vmatprep.mubr.f32.mxu0 0.0
        %416 = vmatmul.mubr.f32.gmra.mrb[0].mxu0 %v348
        %v417 = vpop.f32.mrb[0].mxu0
        %v418 = vadd.f32 0.0, %v417
        %v419 = vpop.f32.mrb[0].mxu0
        %420 = vdwg.mxu0
        %v421 = vadd.f32 %v350, %v418
        %v422 = vmax.f32 %v421, 0.0
        %s423 = scalar_lea.vmem %s225, 16 [#allocation3]
        %v424 = vld [vmem:[%s423] sm:$0xff]
        %425 = vmatprep.subr.mxu0 0.0
        %426 = vmatpush1.msra.mxu0 %v261
        %427 = vmatprep.subr.mxu0 0.0
        %428 = vmatpush1.msra.mxu0 %v262
        %429 = vmatprep.subr.mxu0 0.0
        %430 = vmatpush1.msra.mxu0 %v263
        %431 = vmatprep.subr.mxu0 0.0
        %432 = vmatpush1.msra.mxu0 %v264
        %433 = vmatprep.subr.mxu0 0.0
        %434 = vmatpush1.msra.mxu0 %v265
        %435 = vmatprep.subr.mxu0 0.0
        %436 = vmatpush1.msra.mxu0 %v266
        %437 = vmatprep.subr.mxu0 0.0
        %438 = vmatpush1.msra.mxu0 %v267
        %439 = vmatprep.subr.mxu0 0.0
        %440 = vmatpush1.msra.mxu0 %v268
        %441 = vmatprep.subr.mxu0 0.0
        %442 = vmatpush1.msra.mxu0 %v269
        %443 = vmatprep.subr.mxu0 0.0
        %444 = vmatpush1.msra.mxu0 %v270
        %445 = vmatprep.subr.mxu0 0.0
        %446 = vmatpush1.msra.mxu0 %v271
        %447 = vmatprep.subr.mxu0 0.0
        %448 = vmatpush1.msra.mxu0 %v272
        %449 = vmatprep.subr.mxu0 0.0
        %450 = vmatpush1.msra.mxu0 %v273
        %451 = vmatprep.subr.mxu0 0.0
        %452 = vmatpush1.msra.mxu0 %v274
        %453 = vmatprep.subr.mxu0 0.0
        %454 = vmatpush1.msra.mxu0 %v275
        %455 = vmatprep.subr.mxu0 0.0
        %456 = vmatpush1.msra.mxu0 %v276
        %457 = vmatprep.subr.mxu0 0.0
        %458 = vmatpush1.msra.mxu0 0.0
        %459 = vmatprep.subr.mxu0 0.0
        %460 = vmatpush1.msra.mxu0 0.0
        %461 = vmatprep.subr.mxu0 0.0
        %462 = vmatpush1.msra.mxu0 0.0
        %463 = vmatprep.subr.mxu0 0.0
        %464 = vmatpush1.msra.mxu0 0.0
        %465 = vmatprep.subr.mxu0 0.0
        %466 = vmatpush1.msra.mxu0 0.0
        %467 = vmatprep.subr.mxu0 0.0
        %468 = vmatpush1.msra.mxu0 0.0
        %469 = vmatprep.subr.mxu0 0.0
        %470 = vmatpush1.msra.mxu0 0.0
        %471 = vmatprep.subr.mxu0 0.0
        %472 = vmatpush1.msra.mxu0 0.0
        %473 = vmatprep.subr.mxu0 0.0
        %474 = vmatpush1.msra.mxu0 0.0
        %475 = vmatprep.subr.mxu0 0.0
        %476 = vmatpush1.msra.mxu0 0.0
        %477 = vmatprep.subr.mxu0 0.0
        %478 = vmatpush1.msra.mxu0 0.0
        %479 = vmatprep.subr.mxu0 0.0
        %480 = vmatpush1.msra.mxu0 0.0
        %481 = vmatprep.subr.mxu0 0.0
        %482 = vmatpush1.msra.mxu0 0.0
        %483 = vmatprep.subr.mxu0 0.0
        %484 = vmatpush1.msra.mxu0 0.0
        %485 = vmatprep.subr.mxu0 0.0
        %486 = vmatpush1.msra.mxu0 0.0
        %487 = vmatprep.subr.mxu0 0.0
        %488 = vmatpush1.msra.mxu0 0.0
        %489 = vmatprep.mubr.f32.mxu0 0.0
        %490 = vmatmul.mubr.f32.gmra.mrb[0].mxu0 %v422
        %v491 = vpop.f32.mrb[0].mxu0
        %v492 = vadd.f32 0.0, %v491
        %v493 = vpop.f32.mrb[0].mxu0
        %494 = vdwg.mxu0
        %v495 = vadd.f32 %v424, %v492
        %v496 = vmax.f32 %v495, 0.0
        %s497 = scalar_lea.vmem %s225, 24 [#allocation3]
        %v498 = vld [vmem:[%s497] sm:$0xff]
        %499 = vmatprep.subr.mxu0 0.0
        %500 = vmatpush1.msra.mxu0 %v261
        %501 = vmatprep.subr.mxu0 0.0
        %502 = vmatpush1.msra.mxu0 %v262
        %503 = vmatprep.subr.mxu0 0.0
        %504 = vmatpush1.msra.mxu0 %v263
        %505 = vmatprep.subr.mxu0 0.0
        %506 = vmatpush1.msra.mxu0 %v264
        %507 = vmatprep.subr.mxu0 0.0
        %508 = vmatpush1.msra.mxu0 %v265
        %509 = vmatprep.subr.mxu0 0.0
        %510 = vmatpush1.msra.mxu0 %v266
        %511 = vmatprep.subr.mxu0 0.0
        %512 = vmatpush1.msra.mxu0 %v267
        %513 = vmatprep.subr.mxu0 0.0
        %514 = vmatpush1.msra.mxu0 %v268
        %515 = vmatprep.subr.mxu0 0.0
        %516 = vmatpush1.msra.mxu0 %v269
        %517 = vmatprep.subr.mxu0 0.0
        %518 = vmatpush1.msra.mxu0 %v270
        %519 = vmatprep.subr.mxu0 0.0
        %520 = vmatpush1.msra.mxu0 %v271
        %521 = vmatprep.subr.mxu0 0.0
        %522 = vmatpush1.msra.mxu0 %v272
        %523 = vmatprep.subr.mxu0 0.0
        %524 = vmatpush1.msra.mxu0 %v273
        %525 = vmatprep.subr.mxu0 0.0
        %526 = vmatpush1.msra.mxu0 %v274
        %527 = vmatprep.subr.mxu0 0.0
        %528 = vmatpush1.msra.mxu0 %v275
        %529 = vmatprep.subr.mxu0 0.0
        %530 = vmatpush1.msra.mxu0 %v276
        %531 = vmatprep.subr.mxu0 0.0
        %532 = vmatpush1.msra.mxu0 0.0
        %533 = vmatprep.subr.mxu0 0.0
        %534 = vmatpush1.msra.mxu0 0.0
        %535 = vmatprep.subr.mxu0 0.0
        %536 = vmatpush1.msra.mxu0 0.0
        %537 = vmatprep.subr.mxu0 0.0
        %538 = vmatpush1.msra.mxu0 0.0
        %539 = vmatprep.subr.mxu0 0.0
        %540 = vmatpush1.msra.mxu0 0.0
        %541 = vmatprep.subr.mxu0 0.0
        %542 = vmatpush1.msra.mxu0 0.0
        %543 = vmatprep.subr.mxu0 0.0
        %544 = vmatpush1.msra.mxu0 0.0
        %545 = vmatprep.subr.mxu0 0.0
        %546 = vmatpush1.msra.mxu0 0.0
        %547 = vmatprep.subr.mxu0 0.0
        %548 = vmatpush1.msra.mxu0 0.0
        %549 = vmatprep.subr.mxu0 0.0
        %550 = vmatpush1.msra.mxu0 0.0
        %551 = vmatprep.subr.mxu0 0.0
        %552 = vmatpush1.msra.mxu0 0.0
        %553 = vmatprep.subr.mxu0 0.0
        %554 = vmatpush1.msra.mxu0 0.0
        %555 = vmatprep.subr.mxu0 0.0
        %556 = vmatpush1.msra.mxu0 0.0
        %557 = vmatprep.subr.mxu0 0.0
        %558 = vmatpush1.msra.mxu0 0.0
        %559 = vmatprep.subr.mxu0 0.0
        %560 = vmatpush1.msra.mxu0 0.0
        %561 = vmatprep.subr.mxu0 0.0
        %562 = vmatpush1.msra.mxu0 0.0
        %563 = vmatprep.mubr.f32.mxu0 0.0
        %564 = vmatmul.mubr.f32.gmra.mrb[0].mxu0 %v496
        %v565 = vpop.f32.mrb[0].mxu0
        %v566 = vadd.f32 0.0, %v565
        %v567 = vpop.f32.mrb[0].mxu0
        %568 = vdwg.mxu0
        %v569 = vadd.f32 %v498, %v566
        %v570 = vmax.f32 %v569, 0.0
        %571 = vst [vmem:[#allocation2] sm:$0xff] %v570
        %p572 = scmp.eq.s32.totalorder %s25, 1
        // Predicated region
        $region53: #{tpu_custom_call.1} parent=35 // pred_check
          %p573 = pneg %p572
        $region54: #{tpu_custom_call.1} parent=35 // pred_check_branch
          %575 = sbr.rel (%p573) target = $region56
        $region55: #{tpu_custom_call.1} parent=35 // pred_region
          %v576 = vld [vmem:[#allocation2] sm:$0xff]
          %v577 = vld [vmem:[#allocation8] sm:$0xff]
          %v578 = vld [vmem:[#allocation8 + $0x8] sm:$0xff]
          %v579 = vld [vmem:[#allocation8 + $0x10] sm:$0xff]
          %v580 = vld [vmem:[#allocation8 + $0x18] sm:$0xff]
          %v581 = vld [vmem:[#allocation8 + $0x20] sm:$0xff]
          %v582 = vld [vmem:[#allocation8 + $0x28] sm:$0xff]
          %v583 = vld [vmem:[#allocation8 + $0x30] sm:$0xff]
          %v584 = vld [vmem:[#allocation8 + $0x38] sm:$0xff]
          %v585 = vld [vmem:[#allocation8 + $0x40] sm:$0xff]
          %v586 = vld [vmem:[#allocation8 + $0x48] sm:$0xff]
          %v587 = vld [vmem:[#allocation8 + $0x50] sm:$0xff]
          %v588 = vld [vmem:[#allocation8 + $0x58] sm:$0xff]
          %v589 = vld [vmem:[#allocation8 + $0x60] sm:$0xff]
          %v590 = vld [vmem:[#allocation8 + $0x68] sm:$0xff]
          %v591 = vld [vmem:[#allocation8 + $0x70] sm:$0xff]
          %v592 = vld [vmem:[#allocation8 + $0x78] sm:$0xff]
          %v593 = vld [vmem:[%s3] sm:$0x1]
          %v595 = vlaneseq
          %v596 = vshrl.u32 %v595, 7
          %v597 = vsub.s32 0, %v596
          %v598 = vrot.slane %v593, %v597
          %600 = vmatprep.subr.mxu0 0.0
          %601 = vmatpush1.msra.mxu0 %v577
          %602 = vmatprep.subr.mxu0 0.0
          %603 = vmatpush1.msra.mxu0 %v578
          %604 = vmatprep.subr.mxu0 0.0
          %605 = vmatpush1.msra.mxu0 %v579
          %606 = vmatprep.subr.mxu0 0.0
          %607 = vmatpush1.msra.mxu0 %v580
          %608 = vmatprep.subr.mxu0 0.0
          %609 = vmatpush1.msra.mxu0 %v581
          %610 = vmatprep.subr.mxu0 0.0
          %611 = vmatpush1.msra.mxu0 %v582
          %612 = vmatprep.subr.mxu0 0.0
          %613 = vmatpush1.msra.mxu0 %v583
          %614 = vmatprep.subr.mxu0 0.0
          %615 = vmatpush1.msra.mxu0 %v584
          %616 = vmatprep.subr.mxu0 0.0
          %617 = vmatpush1.msra.mxu0 %v585
          %618 = vmatprep.subr.mxu0 0.0
          %619 = vmatpush1.msra.mxu0 %v586
          %620 = vmatprep.subr.mxu0 0.0
          %621 = vmatpush1.msra.mxu0 %v587
          %622 = vmatprep.subr.mxu0 0.0
          %623 = vmatpush1.msra.mxu0 %v588
          %624 = vmatprep.subr.mxu0 0.0
          %625 = vmatpush1.msra.mxu0 %v589
          %626 = vmatprep.subr.mxu0 0.0
          %627 = vmatpush1.msra.mxu0 %v590
          %628 = vmatprep.subr.mxu0 0.0
          %629 = vmatpush1.msra.mxu0 %v591
          %630 = vmatprep.subr.mxu0 0.0
          %631 = vmatpush1.msra.mxu0 %v592
          %632 = vmatprep.subr.mxu0 0.0
          %633 = vmatpush1.msra.mxu0 0.0
          %634 = vmatprep.subr.mxu0 0.0
          %635 = vmatpush1.msra.mxu0 0.0
          %636 = vmatprep.subr.mxu0 0.0
          %637 = vmatpush1.msra.mxu0 0.0
          %638 = vmatprep.subr.mxu0 0.0
          %639 = vmatpush1.msra.mxu0 0.0
          %640 = vmatprep.subr.mxu0 0.0
          %641 = vmatpush1.msra.mxu0 0.0
          %642 = vmatprep.subr.mxu0 0.0
          %643 = vmatpush1.msra.mxu0 0.0
          %644 = vmatprep.subr.mxu0 0.0
          %645 = vmatpush1.msra.mxu0 0.0
          %646 = vmatprep.subr.mxu0 0.0
          %647 = vmatpush1.msra.mxu0 0.0
          %648 = vmatprep.subr.mxu0 0.0
          %649 = vmatpush1.msra.mxu0 0.0
          %650 = vmatprep.subr.mxu0 0.0
          %651 = vmatpush1.msra.mxu0 0.0
          %652 = vmatprep.subr.mxu0 0.0
          %653 = vmatpush1.msra.mxu0 0.0
          %654 = vmatprep.subr.mxu0 0.0
          %655 = vmatpush1.msra.mxu0 0.0
          %656 = vmatprep.subr.mxu0 0.0
          %657 = vmatpush1.msra.mxu0 0.0
          %658 = vmatprep.subr.mxu0 0.0
          %659 = vmatpush1.msra.mxu0 0.0
          %660 = vmatprep.subr.mxu0 0.0
          %661 = vmatpush1.msra.mxu0 0.0
          %662 = vmatprep.subr.mxu0 0.0
          %663 = vmatpush1.msra.mxu0 0.0
          %664 = vmatprep.mubr.f32.mxu0 0.0
          %665 = vmatmul.mubr.f32.gmra.mrb[0].mxu0 %v576
          %v666 = vpop.f32.mrb[0].mxu0
          %v667 = vadd.f32 %v598, %v666
          %v668 = vpop.f32.mrb[0].mxu0
          %669 = vdwg.mxu0
          %670 = vst [vmem:[#allocation9] sm:$0xff] %v667
        $region56: #{tpu_custom_call.1} parent=35 // pred_fallthru
          _
        // Predicated region
        $region57: #{tpu_custom_call.1} parent=35 // pred_check
          %p671 = pneg %p141
        $region58: #{tpu_custom_call.1} parent=35 // pred_check_branch
          %673 = sbr.rel (%p671) target = $region60
        $region59: #{tpu_custom_call.1} parent=35 // pred_region
          %s675 = ssub.s32 128, 128
          %676 = vsyncadd [#allocation5], %s675
          %s677 = smul.addr %s24, 128
          %s678 = scalar_lea.hbm %s4, %s677
          %s680 = sshll.u32 [#allocation9], 4
          %s681 = int_to_ptr.vmem [resolvable:$true] %s680
          %683 = dma.vmem_to_hbm [thread:$0]  %s681, 128, %s678, [#allocation5]
        $region60: #{tpu_custom_call.1} parent=35 // pred_fallthru
          _
        // Predicated region
        $region61: #{tpu_custom_call.1} parent=35 // pred_check
          %p684 = pneg %p141
        $region62: #{tpu_custom_call.1} parent=35 // pred_check_branch
          %686 = sbr.rel (%p684) target = $region64
        $region63: #{tpu_custom_call.1} parent=35 // pred_region
          %687 = dma.done [#allocation5], 128
        $region64: #{tpu_custom_call.1} parent=35 // pred_fallthru
          _
      $region36: #{tpu_custom_call.1} parent=5 // pred_fallthru
        _
      %p688 = scmp.le.s32.totalorder 2, %s15
      // Predicated region
      $region65: #{tpu_custom_call.1} parent=5 // pred_check
        %p689 = pneg %p688
      $region66: #{tpu_custom_call.1} parent=5 // pred_check_branch
        %691 = sbr.rel (%p689) target = $region68
      $region67: #{tpu_custom_call.1} parent=5 // pred_region
        %s692 = ssub.s32 %s15, 2
      $region68: #{tpu_custom_call.1} parent=5 // pred_fallthru
        _
    $region6: #{tpu_custom_call.1} parent=1 // loop_footer
      %s19 = sadd.s32 1, %s15
    $region7: #{tpu_custom_call.1} parent=1 // loop_footer_branch
      %14 = sbr.rel target = $region3
    $region8: #{tpu_custom_call.1} parent=1 // loop_exit
      _
    %693 = vsyncpa [#allocation4], 1
    %s694 = scalar_lea.sflag [#allocation4], 1
    %695 = vsyncpa %s694, 1
    %696 = vsyncpa [#allocation7], 1
    %697 = vsyncpa [#allocation5], 1
    %s698 = scalar_lea.sflag [#allocation5], 1
    %699 = vsyncpa %s698, 1

</llo_original>
